<compile_context>
chip_gen: v6e
topology: v6e:2x2x1
jax: 0.10.0
libtpu: 0.0.40
codegen_flags: <defaults>
</compile_context>

<pallas_src>
import functools

import jax
import jax.numpy as jnp
from jax import lax
from jax.experimental import pallas as pl
from jax.experimental.pallas import tpu as pltpu


def self_attention_kernel(x_ref, wqkv_ref, bqkv_ref, o_ref, *, scale, tb, s, d):
    # x_ref: (TB, S, D); wqkv_ref: (D, 3D) pre-transposed; bqkv_ref: (1, 3D)
    mm_dtype = x_ref.dtype  # keep MXU operands in the input dtype (bf16-friendly)

    # Fused QKV projection: one MXU matmul over TB*S rows, f32 accumulation.
    x2 = x_ref[...].reshape(tb * s, d)
    qkv = jnp.dot(x2, wqkv_ref[...], preferred_element_type=jnp.float32)
    qkv = qkv + bqkv_ref[...].astype(jnp.float32)          # (TB*S, 3D)
    qkv = qkv.reshape(tb, s, 3 * d)

    # Apply 1/sqrt(D) to q (cheaper than scaling the (S,S) score matrix).
    q = (qkv[:, :, :d] * scale).astype(mm_dtype)
    k = qkv[:, :, d:2 * d].astype(mm_dtype)
    v = qkv[:, :, 2 * d:].astype(mm_dtype)

    # Batched Q @ K^T: contract last dims directly, no transpose materialized.
    scores = lax.dot_general(
        q, k,
        dimension_numbers=(((2,), (2,)), ((0,), (0,))),
        preferred_element_type=jnp.float32)                # (TB, S, S) f32

    # Numerically stable softmax over the last axis, stats in f32.
    scores = scores - jnp.max(scores, axis=-1, keepdims=True)
    p = jnp.exp(scores)
    w = p * pl.reciprocal(jnp.sum(p, axis=-1, keepdims=True), approx=True)

    # attn_weights @ V (batched), f32 accumulation.
    out = lax.dot_general(
        w.astype(mm_dtype), v,
        dimension_numbers=(((2,), (1,)), ((0,), (0,))),
        preferred_element_type=jnp.float32)                # (TB, S, D)
    o_ref[...] = out.astype(o_ref.dtype)


def _pick_batch_tile(B, S, D):
    """Batch elements per grid step: aim for >=256 projection rows while keeping
    the f32 intermediates (qkv, scores, out) comfortably inside scoped VMEM."""
    tb = max(1, min(B, max(1, 256 // max(S, 1))))

    def footprint_bytes(t):
        # x + qkv + q/k/v + out (~8 S*D f32 arrays) + scores & probs (~2 S*S)
        return 4 * t * (S * D * 8 + S * S * 2)

    while tb > 1 and footprint_bytes(tb) > (8 << 20):
        tb -= 1
    while B % tb != 0:  # keep the grid exact
        tb -= 1
    return tb


def self_attention(x, wq, bq, wk, bk, wv, bv):
    """x: (B, S, D); wq/wk/wv: (D, D) in nn.Linear (out, in) layout; b*: (D,)."""
    B, S, D = x.shape
    scale = 1.0 / (D ** 0.5)

    # Host-side packing: pre-transposed (in, 3*out) weight + (1, 3*out) bias.
    w_qkv = jnp.concatenate([wq.T, wk.T, wv.T], axis=1).astype(x.dtype)   # (D, 3D)
    b_qkv = jnp.concatenate([bq, bk, bv]).reshape(1, 3 * D).astype(jnp.float32)

    tb = _pick_batch_tile(B, S, D)
    kernel = functools.partial(self_attention_kernel, scale=scale, tb=tb, s=S, d=D)

    return pl.pallas_call(
        kernel,
        out_shape=jax.ShapeDtypeStruct((B, S, D), x.dtype),
        grid_spec=pltpu.PrefetchScalarGridSpec(
            num_scalar_prefetch=0,
            grid=(B // tb,),
            in_specs=[
                pl.BlockSpec((tb, S, D), lambda b: (b, 0, 0)),
                pl.BlockSpec((D, 3 * D), lambda b: (0, 0)),
                pl.BlockSpec((1, 3 * D), lambda b: (0, 0)),
            ],
            out_specs=pl.BlockSpec((tb, S, D), lambda b: (b, 0, 0)),
        ),
        compiler_params=pltpu.CompilerParams(
            dimension_semantics=("parallel",)),
    )(x, w_qkv, b_qkv)


def reference(x, wq, bq, wk, bk, wv, bv):
    D = x.shape[-1]
    q = jnp.einsum("bsd,ed->bse", x, wq) + bq
    k = jnp.einsum("bsd,ed->bse", x, wk) + bk
    v = jnp.einsum("bsd,ed->bse", x, wv) + bv
    s = jnp.einsum("bqd,bkd->bqk", q, k) / (D ** 0.5)
    w = jax.nn.softmax(s, axis=-1)
    return jnp.einsum("bqk,bkd->bqd", w, v)


if __name__ == "__main__":
    B, S, D = 2, 8, 32
    key = jax.random.PRNGKey(0)
    kx, kwq, kbq, kwk, kbk, kwv, kbv = jax.random.split(key, 7)

    x = jax.random.normal(kx, (B, S, D), dtype=jnp.float32)
    # nn.Linear-style params (uniform in [-1/sqrt(D), 1/sqrt(D)])
    bound = 1.0 / (D ** 0.5)
    wq = jax.random.uniform(kwq, (D, D), jnp.float32, -bound, bound)
    bq = jax.random.uniform(kbq, (D,), jnp.float32, -bound, bound)
    wk = jax.random.uniform(kwk, (D, D), jnp.float32, -bound, bound)
    bk = jax.random.uniform(kbk, (D,), jnp.float32, -bound, bound)
    wv = jax.random.uniform(kwv, (D, D), jnp.float32, -bound, bound)
    bv = jax.random.uniform(kbv, (D,), jnp.float32, -bound, bound)

    out = self_attention(x, wq, bq, wk, bk, wv, bv)
    out = jax.block_until_ready(out)

    ref = reference(x, wq, bq, wk, bk, wv, bv)
    assert out.shape == (B, S, D)
    # tolerance accommodates the approximate (EUP) softmax reciprocal
    assert jnp.allclose(out, ref, atol=5e-3, rtol=5e-3), "mismatch vs reference"
    print("KERNEL_OK")
</pallas_src>

<mosaic_0001>
module attributes {stable_mosaic.version = 11 : i64} {
  func.func @self_attention_kernel(%arg0: i32, %arg1: memref<2x8x32xf32, #tpu.memory_space<vmem>>, %arg2: memref<32x96xf32, #tpu.memory_space<vmem>>, %arg3: memref<1x96xf32, #tpu.memory_space<vmem>>, %arg4: memref<2x8x32xf32, #tpu.memory_space<vmem>>) attributes {dimension_semantics = [#tpu.dimension_semantics<parallel>], iteration_bounds = array<i64: 1>, scalar_prefetch = 0 : i64, scratch_operands = 0 : i64, tpu.core_type = #tpu.core_type<tc>, window_params = [{transform_indices = @transform_0, window_bounds = array<i64: 2, 8, 32>}, {pipeline_mode = #tpu.pipeline_mode<synchronous>, transform_indices = @transform_1, window_bounds = array<i64: 32, 96>}, {pipeline_mode = #tpu.pipeline_mode<synchronous>, transform_indices = @transform_2, window_bounds = array<i64: 1, 96>}, {transform_indices = @transform_3, window_bounds = array<i64: 2, 8, 32>}]} {
    %c0 = arith.constant 0 : index
    %c0_0 = arith.constant 0 : index
    %c0_1 = arith.constant 0 : index
    %0 = vector.load %arg1[%c0, %c0_0, %c0_1] : memref<2x8x32xf32, #tpu.memory_space<vmem>>, vector<2x8x32xf32>
    %1 = vector.shape_cast %0 : vector<2x8x32xf32> to vector<16x32xf32>
    %c0_2 = arith.constant 0 : index
    %c0_3 = arith.constant 0 : index
    %2 = vector.load %arg2[%c0_2, %c0_3] : memref<32x96xf32, #tpu.memory_space<vmem>>, vector<32x96xf32>
    %cst = arith.constant dense<0.000000e+00> : vector<16x96xf32>
    %3 = tpu.matmul %1, %2, %cst {dimension_numbers = #tpu.dot_dimension_numbers<[1], [0], [0], [1], [0, 0, 1, 1], [], []>} : vector<16x32xf32>, vector<32x96xf32>, vector<16x96xf32> -> vector<16x96xf32>
    %c0_4 = arith.constant 0 : index
    %c0_5 = arith.constant 0 : index
    %4 = vector.load %arg3[%c0_4, %c0_5] : memref<1x96xf32, #tpu.memory_space<vmem>>, vector<1x96xf32>
    %5 = vector.broadcast %4 : vector<1x96xf32> to vector<16x96xf32>
    %6 = arith.addf %3, %5 : vector<16x96xf32>
    %7 = vector.shape_cast %6 : vector<16x96xf32> to vector<2x8x96xf32>
    %8 = vector.extract_strided_slice %7 {offsets = [0, 0, 0], sizes = [2, 8, 32], strides = [1, 1, 1]} : vector<2x8x96xf32> to vector<2x8x32xf32>
    %cst_6 = arith.constant 0.176776692 : f32
    %9 = vector.broadcast %cst_6 : f32 to vector<2x8x32xf32>
    %10 = arith.mulf %8, %9 : vector<2x8x32xf32>
    %11 = vector.extract_strided_slice %7 {offsets = [0, 0, 32], sizes = [2, 8, 32], strides = [1, 1, 1]} : vector<2x8x96xf32> to vector<2x8x32xf32>
    %12 = vector.extract_strided_slice %7 {offsets = [0, 0, 64], sizes = [2, 8, 32], strides = [1, 1, 1]} : vector<2x8x96xf32> to vector<2x8x32xf32>
    %cst_7 = arith.constant dense<0.000000e+00> : vector<2x8x8xf32>
    %13 = tpu.matmul %10, %11, %cst_7 {dimension_numbers = #tpu.dot_dimension_numbers<[2], [2], [1], [1], [0, 0, 0, 1, 1, 1], [0], [0]>} : vector<2x8x32xf32>, vector<2x8x32xf32>, vector<2x8x8xf32> -> vector<2x8x8xf32>
    %cst_8 = arith.constant dense<0xFF800000> : vector<2x8xf32>
    %14 = vector.multi_reduction <maximumf>, %13, %cst_8 [2] : vector<2x8x8xf32> to vector<2x8xf32>
    %15 = vector.shape_cast %14 : vector<2x8xf32> to vector<2x8x1xf32>
    %16 = vector.broadcast %15 : vector<2x8x1xf32> to vector<2x8x8xf32>
    %17 = arith.subf %13, %16 : vector<2x8x8xf32>
    %18 = math.exp %17 : vector<2x8x8xf32>
    %cst_9 = arith.constant dense<0.000000e+00> : vector<2x8xf32>
    %19 = vector.multi_reduction <add>, %18, %cst_9 [2] : vector<2x8x8xf32> to vector<2x8xf32>
    %20 = vector.shape_cast %19 : vector<2x8xf32> to vector<2x8x1xf32>
    %21 = tpu.reciprocal %20 {approx = true} : vector<2x8x1xf32> -> vector<2x8x1xf32>
    %22 = vector.broadcast %21 : vector<2x8x1xf32> to vector<2x8x8xf32>
    %23 = arith.mulf %18, %22 : vector<2x8x8xf32>
    %cst_10 = arith.constant dense<0.000000e+00> : vector<2x8x32xf32>
    %24 = tpu.matmul %23, %12, %cst_10 {dimension_numbers = #tpu.dot_dimension_numbers<[2], [1], [1], [2], [0, 0, 0, 1, 1, 2], [0], [0]>} : vector<2x8x8xf32>, vector<2x8x32xf32>, vector<2x8x32xf32> -> vector<2x8x32xf32>
    %c0_11 = arith.constant 0 : index
    %c0_12 = arith.constant 0 : index
    %c0_13 = arith.constant 0 : index
    %25 = vector.load %arg4[%c0_11, %c0_12, %c0_13] : memref<2x8x32xf32, #tpu.memory_space<vmem>>, vector<2x8x32xf32>
    tpu.vector_store %arg4[%c0_11, %c0_12, %c0_13], %24 {strides = array<i32>} : memref<2x8x32xf32, #tpu.memory_space<vmem>>, vector<2x8x32xf32>,
    return
  }
  func.func @transform_0(%arg0: i32) -> (i32, i32, i32) {
    %c0_i32 = arith.constant 0 : i32
    %c0_i32_0 = arith.constant 0 : i32
    %c0_i32_1 = arith.constant 0 : i32
    return %arg0, %c0_i32, %c0_i32_0 : i32, i32, i32
  }
  func.func @transform_1(%arg0: i32) -> (i32, i32) {
    %c0_i32 = arith.constant 0 : i32
    %c0_i32_0 = arith.constant 0 : i32
    %c0_i32_1 = arith.constant 0 : i32
    return %c0_i32, %c0_i32_0 : i32, i32
  }
  func.func @transform_2(%arg0: i32) -> (i32, i32) {
    %c0_i32 = arith.constant 0 : i32
    %c0_i32_0 = arith.constant 0 : i32
    %c0_i32_1 = arith.constant 0 : i32
    return %c0_i32, %c0_i32_0 : i32, i32
  }
  func.func @transform_3(%arg0: i32) -> (i32, i32, i32) {
    %c0_i32 = arith.constant 0 : i32
    %c0_i32_0 = arith.constant 0 : i32
    %c0_i32_1 = arith.constant 0 : i32
    return %arg0, %c0_i32, %c0_i32_0 : i32, i32, i32
  }
}

</mosaic_0001>

<llo_original>
// kernel: tpu_custom_call.1
$region0: #{tpu_custom_call.1}
  #allocation0 [shape = 'u32[]', space=smem, size = 0x4, offset = 0x4, fixed_abs, tag = 'smem constant byte address 0x4 - core index']
  #allocation1 [shape = 'u32[144,128]{1,0:T(1,128)}', space=vmem, size = 0x12000, scoped, tag = 'internal scratch']
  %s0 = inlined_call_operand.hbm [shape: f32[2,8,32], index: 0, kind: input, shape index: {}]
  %s1 = inlined_call_operand.hbm [shape: f32[32,96], index: 1, kind: input, shape index: {}]
  %s2 = inlined_call_operand.vmem [shape: f32[1,96], index: 2, kind: input, shape index: {}]
  %s3 = inlined_call_operand.hbm [shape: f32[2,8,32], index: 3, kind: output, shape index: {}]
  %s4 = sld [smem:[#allocation0]]
  $region30: #{tpu_custom_call.1} parent=0
    _
  %s6 = ssub.s32 1, %s4
  %s7 = scalar_select 0, %s6, %s4
  $region1: #{tpu_custom_call.1} parent=0
    #allocation2 [shape = 'u8[8192]{0}', space=vmem, size = 0x2000, scoped, tag = 'input window, operand 0, single buffered']
    #allocation3 [shape = 's32[1]{0}', space=sflag, size = 0x4, scoped, tag = 'scoped memory for tpu_custom_call.1']
    #allocation4 [shape = 's32[1]{0}', space=sflag, size = 0x4, scoped, tag = 'scoped memory for tpu_custom_call.1']
    #allocation5 [shape = 'u8[16384]{0}', space=vmem, size = 0x4000, scoped, tag = 'input window, operand 1, single buffered']
    #allocation6 [shape = 's32[1]{0}', space=sflag, size = 0x4, scoped, tag = 'scoped memory for tpu_custom_call.1']
    #allocation7 [shape = 'u8[8192]{0}', space=vmem, size = 0x2000, scoped, tag = 'output window, operand 0, single buffered']
    %8 = vsyncpa [#allocation3], 0
    %9 = vsyncpa [#allocation6], 0
    %10 = vsyncpa [#allocation4], 0
    // Predicated region
    $region2: #{tpu_custom_call.1} parent=1 // pred_check
      _
    $region3: #{tpu_custom_call.1} parent=1 // pred_check_branch
      %12 = sbr.rel (0) target = $region5
    $region4: #{tpu_custom_call.1} parent=1 // pred_region
      %s14 = ssub.s32 256, 256
      %15 = vsyncadd [#allocation3], %s14
      %s16 = sshll.u32 [#allocation2], 4
      %s17 = int_to_ptr.vmem [resolvable:$true] %s16
      %22 = dma.hbm_to_vmem [thread:$0]  %s0, 256, %s17, [#allocation3], 128, 128, 8
    $region5: #{tpu_custom_call.1} parent=1 // pred_fallthru
      _
    // Predicated region
    $region6: #{tpu_custom_call.1} parent=1 // pred_check
      _
    $region7: #{tpu_custom_call.1} parent=1 // pred_check_branch
      %24 = sbr.rel (0) target = $region9
    $region8: #{tpu_custom_call.1} parent=1 // pred_region
      %s26 = ssub.s32 512, 512
      %27 = vsyncadd [#allocation6], %s26
      %s28 = sshll.u32 [#allocation5], 4
      %s29 = int_to_ptr.vmem [resolvable:$true] %s28
      %34 = dma.hbm_to_vmem [thread:$0]  %s1, 512, %s29, [#allocation6], 128, 128, 8
    $region9: #{tpu_custom_call.1} parent=1 // pred_fallthru
      _
    // Predicated region
    $region10: #{tpu_custom_call.1} parent=1 // pred_check
      _
    $region11: #{tpu_custom_call.1} parent=1 // pred_check_branch
      %36 = sbr.rel (0) target = $region13
    $region12: #{tpu_custom_call.1} parent=1 // pred_region
      _
    $region13: #{tpu_custom_call.1} parent=1 // pred_fallthru
      _
    // Predicated region
    $region14: #{tpu_custom_call.1} parent=1 // pred_check
      _
    $region15: #{tpu_custom_call.1} parent=1 // pred_check_branch
      %38 = sbr.rel (0) target = $region17
    $region16: #{tpu_custom_call.1} parent=1 // pred_region
      %39 = dma.done [#allocation3], 256
    $region17: #{tpu_custom_call.1} parent=1 // pred_fallthru
      _
    // Predicated region
    $region18: #{tpu_custom_call.1} parent=1 // pred_check
      _
    $region19: #{tpu_custom_call.1} parent=1 // pred_check_branch
      %41 = sbr.rel (0) target = $region21
    $region20: #{tpu_custom_call.1} parent=1 // pred_region
      %42 = dma.done [#allocation6], 512
    $region21: #{tpu_custom_call.1} parent=1 // pred_fallthru
      _
    %v43 = vld [vmem:[#allocation2] sm:$0xff]
    %v44 = vld [vmem:[#allocation2 + $0x8] sm:$0xff]
    %v45 = vld [vmem:[#allocation5] sm:$0xff]
    %v46 = vld [vmem:[#allocation5 + $0x8] sm:$0xff]
    %v47 = vld [vmem:[#allocation5 + $0x10] sm:$0xff]
    %v48 = vld [vmem:[#allocation5 + $0x18] sm:$0xff]
    %v49 = vld [vmem:[%s2] sm:$0x1]
    %v51 = vlaneseq
    %v52 = vshrl.u32 %v51, 7
    %v53 = vsub.s32 0, %v52
    %v54 = vrot.slane %v49, %v53
    %vm56 = vcmask 261120
    %v58 = vsel %vm56, %v43, 0
    %v61 = vsel %vm56, %v44, 0
    %63 = vmatprep.subr.mxu0 0.0
    %64 = vmatpush1.msra.mxu0 0.0
    %65 = vmatprep.subr.mxu0 0.0
    %66 = vmatpush1.msra.mxu0 0.0
    %67 = vmatprep.subr.mxu0 0.0
    %68 = vmatpush1.msra.mxu0 0.0
    %69 = vmatprep.subr.mxu0 0.0
    %70 = vmatpush1.msra.mxu0 0.0
    %71 = vmatprep.subr.mxu0 0.0
    %72 = vmatpush1.msra.mxu0 0.0
    %73 = vmatprep.subr.mxu0 0.0
    %74 = vmatpush1.msra.mxu0 0.0
    %75 = vmatprep.subr.mxu0 0.0
    %76 = vmatpush1.msra.mxu0 0.0
    %77 = vmatprep.subr.mxu0 0.0
    %78 = vmatpush1.msra.mxu0 0.0
    %79 = vmatprep.subr.mxu0 0.0
    %80 = vmatpush1.msra.mxu0 0.0
    %81 = vmatprep.subr.mxu0 0.0
    %82 = vmatpush1.msra.mxu0 0.0
    %83 = vmatprep.subr.mxu0 0.0
    %84 = vmatpush1.msra.mxu0 0.0
    %85 = vmatprep.subr.mxu0 0.0
    %86 = vmatpush1.msra.mxu0 0.0
    %87 = vmatprep.subr.mxu0 0.0
    %88 = vmatpush1.msra.mxu0 %v48
    %89 = vmatprep.subr.mxu0 0.0
    %90 = vmatpush1.msra.mxu0 %v47
    %91 = vmatprep.subr.mxu0 0.0
    %92 = vmatpush1.msra.mxu0 %v46
    %93 = vmatprep.subr.mxu0 0.0
    %94 = vmatpush1.msra.mxu0 %v45
    %95 = vmatprep.subr.mxu0 0.0
    %96 = vmatpush2.msra.mxu0 0.0
    %97 = vmatprep.subr.mxu0 0.0
    %98 = vmatpush2.msra.mxu0 0.0
    %99 = vmatprep.subr.mxu0 0.0
    %100 = vmatpush2.msra.mxu0 0.0
    %101 = vmatprep.subr.mxu0 0.0
    %102 = vmatpush2.msra.mxu0 0.0
    %103 = vmatprep.subr.mxu0 0.0
    %104 = vmatpush2.msra.mxu0 0.0
    %105 = vmatprep.subr.mxu0 0.0
    %106 = vmatpush2.msra.mxu0 0.0
    %107 = vmatprep.subr.mxu0 0.0
    %108 = vmatpush2.msra.mxu0 0.0
    %109 = vmatprep.subr.mxu0 0.0
    %110 = vmatpush2.msra.mxu0 0.0
    %111 = vmatprep.subr.mxu0 0.0
    %112 = vmatpush2.msra.mxu0 0.0
    %113 = vmatprep.subr.mxu0 0.0
    %114 = vmatpush2.msra.mxu0 0.0
    %115 = vmatprep.subr.mxu0 0.0
    %116 = vmatpush2.msra.mxu0 0.0
    %117 = vmatprep.subr.mxu0 0.0
    %118 = vmatpush2.msra.mxu0 0.0
    %119 = vmatprep.subr.mxu0 0.0
    %120 = vmatpush2.msra.mxu0 0.0
    %121 = vmatprep.subr.mxu0 0.0
    %122 = vmatpush2.msra.mxu0 0.0
    %123 = vmatprep.subr.mxu0 0.0
    %124 = vmatpush2.msra.mxu0 0.0
    %125 = vmatprep.subr.mxu0 0.0
    %126 = vmatpush2.msra.mxu0 0.0
    %127 = vmatprep.mubr.f32.mxu0 0.0
    %128 = vmatmul.mubr.f32.gmra.mxu0 %v58
    %v129 = vpop.f32.mrf.mxu0
    %v130 = vadd.f32 %v54, %v129
    %v131 = vpop.f32.mrf.mxu0
    %132 = vmatprep.mubr.f32.mxu0 0.0
    %133 = vmatmul.mubr.f32.gmra.mxu0 %v61
    %v134 = vpop.f32.mrf.mxu0
    %v135 = vadd.f32 %v54, %v134
    %v136 = vpop.f32.mrf.mxu0
    %137 = vdwg.mxu0
    %v138 = vmul.f32 %v130, 0.17677669
    %v139 = vmul.f32 %v135, 0.17677669
    %141 = vrot.lane.b32.xlu0 %v130, 96
    %v142 = vpop.permute.xlu0 %141
    %v144 = vsel %vm56, %v138, 0
    %v146 = vsel %vm56, %v142, 0
    %148 = vmatprep.subr.mxu0 0.0
    %149 = vmatpush1.xpose.msra.mxu0 0.0
    %150 = vmatprep.subr.mxu0 0.0
    %151 = vmatpush1.xpose.msra.mxu0 0.0
    %152 = vmatprep.subr.mxu0 0.0
    %153 = vmatpush1.xpose.msra.mxu0 0.0
    %154 = vmatprep.subr.mxu0 0.0
    %155 = vmatpush1.xpose.msra.mxu0 0.0
    %156 = vmatprep.subr.mxu0 0.0
    %157 = vmatpush1.xpose.msra.mxu0 0.0
    %158 = vmatprep.subr.mxu0 0.0
    %159 = vmatpush1.xpose.msra.mxu0 0.0
    %160 = vmatprep.subr.mxu0 0.0
    %161 = vmatpush1.xpose.msra.mxu0 0.0
    %162 = vmatprep.subr.mxu0 0.0
    %163 = vmatpush1.xpose.msra.mxu0 0.0
    %164 = vmatprep.subr.mxu0 0.0
    %165 = vmatpush1.xpose.msra.mxu0 0.0
    %166 = vmatprep.subr.mxu0 0.0
    %167 = vmatpush1.xpose.msra.mxu0 0.0
    %168 = vmatprep.subr.mxu0 0.0
    %169 = vmatpush1.xpose.msra.mxu0 0.0
    %170 = vmatprep.subr.mxu0 0.0
    %171 = vmatpush1.xpose.msra.mxu0 0.0
    %172 = vmatprep.subr.mxu0 0.0
    %173 = vmatpush1.xpose.msra.mxu0 0.0
    %174 = vmatprep.subr.mxu0 0.0
    %175 = vmatpush1.xpose.msra.mxu0 0.0
    %176 = vmatprep.subr.mxu0 0.0
    %177 = vmatpush1.xpose.msra.mxu0 0.0
    %178 = vmatprep.subr.mxu0 0.0
    %179 = vmatpush1.xpose.msra.mxu0 %v146
    %180 = vmatprep.subr.mxu0 0.0
    %181 = vmatpush2.xpose.msra.mxu0 0.0
    %182 = vmatprep.subr.mxu0 0.0
    %183 = vmatpush2.xpose.msra.mxu0 0.0
    %184 = vmatprep.subr.mxu0 0.0
    %185 = vmatpush2.xpose.msra.mxu0 0.0
    %186 = vmatprep.subr.mxu0 0.0
    %187 = vmatpush2.xpose.msra.mxu0 0.0
    %188 = vmatprep.subr.mxu0 0.0
    %189 = vmatpush2.xpose.msra.mxu0 0.0
    %190 = vmatprep.subr.mxu0 0.0
    %191 = vmatpush2.xpose.msra.mxu0 0.0
    %192 = vmatprep.subr.mxu0 0.0
    %193 = vmatpush2.xpose.msra.mxu0 0.0
    %194 = vmatprep.subr.mxu0 0.0
    %195 = vmatpush2.xpose.msra.mxu0 0.0
    %196 = vmatprep.subr.mxu0 0.0
    %197 = vmatpush2.xpose.msra.mxu0 0.0
    %198 = vmatprep.subr.mxu0 0.0
    %199 = vmatpush2.xpose.msra.mxu0 0.0
    %200 = vmatprep.subr.mxu0 0.0
    %201 = vmatpush2.xpose.msra.mxu0 0.0
    %202 = vmatprep.subr.mxu0 0.0
    %203 = vmatpush2.xpose.msra.mxu0 0.0
    %204 = vmatprep.subr.mxu0 0.0
    %205 = vmatpush2.xpose.msra.mxu0 0.0
    %206 = vmatprep.subr.mxu0 0.0
    %207 = vmatpush2.xpose.msra.mxu0 0.0
    %208 = vmatprep.subr.mxu0 0.0
    %209 = vmatpush2.xpose.msra.mxu0 0.0
    %210 = vmatprep.subr.mxu0 0.0
    %211 = vmatpush2.xpose.msra.mxu0 0.0
    %212 = vmatprep.mubr.f32.mxu0 0.0
    %213 = vmatmul.mubr.f32.gmra.mxu0 %v144
    %v214 = vpop.f32.mrf.mxu0
    %v215 = vadd.f32 0.0, %v214
    %v216 = vpop.f32.mrf.mxu0
    %217 = vdwg.mxu0
    %219 = vrot.lane.b32.xlu0 %v135, 96
    %v220 = vpop.permute.xlu0 %219
    %v222 = vsel %vm56, %v139, 0
    %v224 = vsel %vm56, %v220, 0
    %226 = vmatprep.subr.mxu0 0.0
    %227 = vmatpush1.xpose.msra.mxu0 0.0
    %228 = vmatprep.subr.mxu0 0.0
    %229 = vmatpush1.xpose.msra.mxu0 0.0
    %230 = vmatprep.subr.mxu0 0.0
    %231 = vmatpush1.xpose.msra.mxu0 0.0
    %232 = vmatprep.subr.mxu0 0.0
    %233 = vmatpush1.xpose.msra.mxu0 0.0
    %234 = vmatprep.subr.mxu0 0.0
    %235 = vmatpush1.xpose.msra.mxu0 0.0
    %236 = vmatprep.subr.mxu0 0.0
    %237 = vmatpush1.xpose.msra.mxu0 0.0
    %238 = vmatprep.subr.mxu0 0.0
    %239 = vmatpush1.xpose.msra.mxu0 0.0
    %240 = vmatprep.subr.mxu0 0.0
    %241 = vmatpush1.xpose.msra.mxu0 0.0
    %242 = vmatprep.subr.mxu0 0.0
    %243 = vmatpush1.xpose.msra.mxu0 0.0
    %244 = vmatprep.subr.mxu0 0.0
    %245 = vmatpush1.xpose.msra.mxu0 0.0
    %246 = vmatprep.subr.mxu0 0.0
    %247 = vmatpush1.xpose.msra.mxu0 0.0
    %248 = vmatprep.subr.mxu0 0.0
    %249 = vmatpush1.xpose.msra.mxu0 0.0
    %250 = vmatprep.subr.mxu0 0.0
    %251 = vmatpush1.xpose.msra.mxu0 0.0
    %252 = vmatprep.subr.mxu0 0.0
    %253 = vmatpush1.xpose.msra.mxu0 0.0
    %254 = vmatprep.subr.mxu0 0.0
    %255 = vmatpush1.xpose.msra.mxu0 0.0
    %256 = vmatprep.subr.mxu0 0.0
    %257 = vmatpush1.xpose.msra.mxu0 %v224
    %258 = vmatprep.subr.mxu0 0.0
    %259 = vmatpush2.xpose.msra.mxu0 0.0
    %260 = vmatprep.subr.mxu0 0.0
    %261 = vmatpush2.xpose.msra.mxu0 0.0
    %262 = vmatprep.subr.mxu0 0.0
    %263 = vmatpush2.xpose.msra.mxu0 0.0
    %264 = vmatprep.subr.mxu0 0.0
    %265 = vmatpush2.xpose.msra.mxu0 0.0
    %266 = vmatprep.subr.mxu0 0.0
    %267 = vmatpush2.xpose.msra.mxu0 0.0
    %268 = vmatprep.subr.mxu0 0.0
    %269 = vmatpush2.xpose.msra.mxu0 0.0
    %270 = vmatprep.subr.mxu0 0.0
    %271 = vmatpush2.xpose.msra.mxu0 0.0
    %272 = vmatprep.subr.mxu0 0.0
    %273 = vmatpush2.xpose.msra.mxu0 0.0
    %274 = vmatprep.subr.mxu0 0.0
    %275 = vmatpush2.xpose.msra.mxu0 0.0
    %276 = vmatprep.subr.mxu0 0.0
    %277 = vmatpush2.xpose.msra.mxu0 0.0
    %278 = vmatprep.subr.mxu0 0.0
    %279 = vmatpush2.xpose.msra.mxu0 0.0
    %280 = vmatprep.subr.mxu0 0.0
    %281 = vmatpush2.xpose.msra.mxu0 0.0
    %282 = vmatprep.subr.mxu0 0.0
    %283 = vmatpush2.xpose.msra.mxu0 0.0
    %284 = vmatprep.subr.mxu0 0.0
    %285 = vmatpush2.xpose.msra.mxu0 0.0
    %286 = vmatprep.subr.mxu0 0.0
    %287 = vmatpush2.xpose.msra.mxu0 0.0
    %288 = vmatprep.subr.mxu0 0.0
    %289 = vmatpush2.xpose.msra.mxu0 0.0
    %290 = vmatprep.mubr.f32.mxu0 0.0
    %291 = vmatmul.mubr.f32.gmra.mxu0 %v222
    %v292 = vpop.f32.mrf.mxu0
    %v293 = vadd.f32 0.0, %v292
    %v294 = vpop.f32.mrf.mxu0
    %295 = vdwg.mxu0
    %vm296 = vcmask 64512
    %v297 = vsel %vm296, %v215, -inf
    %298 = vmax.xlane.f32.xlu0 %v297
    %v299 = vpop.xlane.xlu0 %298
    %v300 = vsel %vm296, %v293, -inf
    %301 = vmax.xlane.f32.xlu0 %v300
    %v302 = vpop.xlane.xlu0 %301
    %v303 = vsub.f32 %v215, %v299
    %v304 = vsub.f32 %v293, %v302
    %v305 = vmul.f32 %v303, 1.442695
    %v306 = vpow.pop %v305
    %v307 = vmul.f32 %v304, 1.442695
    %v308 = vpow.pop %v307
    %v309 = vsel %vm296, %v306, 0.0
    %310 = vadd.xlane.f32.xlu0 %v309
    %v311 = vpop.xlane.xlu0 %310
    %v312 = vsel %vm296, %v308, 0.0
    %313 = vadd.xlane.f32.xlu0 %v312
    %v314 = vpop.xlane.xlu0 %313
    %v315 = vrcp.pop %v311
    %v316 = vrcp.pop %v314
    %v317 = vmul.f32 %v306, %v315
    %v318 = vmul.f32 %v308, %v316
    %319 = vrot.lane.b32.xlu0 %v130, 64
    %v320 = vpop.permute.xlu0 %319
    %v323 = vsel %vm296, %v317, 0
    %325 = vmatprep.subr.mxu0 0.0
    %326 = vmatpush1.msra.mxu0 0.0
    %327 = vmatprep.subr.mxu0 0.0
    %328 = vmatpush1.msra.mxu0 0.0
    %329 = vmatprep.subr.mxu0 0.0
    %330 = vmatpush1.msra.mxu0 0.0
    %331 = vmatprep.subr.mxu0 0.0
    %332 = vmatpush1.msra.mxu0 0.0
    %333 = vmatprep.subr.mxu0 0.0
    %334 = vmatpush1.msra.mxu0 0.0
    %335 = vmatprep.subr.mxu0 0.0
    %336 = vmatpush1.msra.mxu0 0.0
    %337 = vmatprep.subr.mxu0 0.0
    %338 = vmatpush1.msra.mxu0 0.0
    %339 = vmatprep.subr.mxu0 0.0
    %340 = vmatpush1.msra.mxu0 0.0
    %341 = vmatprep.subr.mxu0 0.0
    %342 = vmatpush1.msra.mxu0 0.0
    %343 = vmatprep.subr.mxu0 0.0
    %344 = vmatpush1.msra.mxu0 0.0
    %345 = vmatprep.subr.mxu0 0.0
    %346 = vmatpush1.msra.mxu0 0.0
    %347 = vmatprep.subr.mxu0 0.0
    %348 = vmatpush1.msra.mxu0 0.0
    %349 = vmatprep.subr.mxu0 0.0
    %350 = vmatpush1.msra.mxu0 0.0
    %351 = vmatprep.subr.mxu0 0.0
    %352 = vmatpush1.msra.mxu0 0.0
    %353 = vmatprep.subr.mxu0 0.0
    %354 = vmatpush1.msra.mxu0 0.0
    %355 = vmatprep.subr.mxu0 0.0
    %356 = vmatpush1.msra.mxu0 %v320
    %357 = vmatprep.subr.mxu0 0.0
    %358 = vmatpush2.msra.mxu0 0.0
    %359 = vmatprep.subr.mxu0 0.0
    %360 = vmatpush2.msra.mxu0 0.0
    %361 = vmatprep.subr.mxu0 0.0
    %362 = vmatpush2.msra.mxu0 0.0
    %363 = vmatprep.subr.mxu0 0.0
    %364 = vmatpush2.msra.mxu0 0.0
    %365 = vmatprep.subr.mxu0 0.0
    %366 = vmatpush2.msra.mxu0 0.0
    %367 = vmatprep.subr.mxu0 0.0
    %368 = vmatpush2.msra.mxu0 0.0
    %369 = vmatprep.subr.mxu0 0.0
    %370 = vmatpush2.msra.mxu0 0.0
    %371 = vmatprep.subr.mxu0 0.0
    %372 = vmatpush2.msra.mxu0 0.0
    %373 = vmatprep.subr.mxu0 0.0
    %374 = vmatpush2.msra.mxu0 0.0
    %375 = vmatprep.subr.mxu0 0.0
    %376 = vmatpush2.msra.mxu0 0.0
    %377 = vmatprep.subr.mxu0 0.0
    %378 = vmatpush2.msra.mxu0 0.0
    %379 = vmatprep.subr.mxu0 0.0
    %380 = vmatpush2.msra.mxu0 0.0
    %381 = vmatprep.subr.mxu0 0.0
    %382 = vmatpush2.msra.mxu0 0.0
    %383 = vmatprep.subr.mxu0 0.0
    %384 = vmatpush2.msra.mxu0 0.0
    %385 = vmatprep.subr.mxu0 0.0
    %386 = vmatpush2.msra.mxu0 0.0
    %387 = vmatprep.subr.mxu0 0.0
    %388 = vmatpush2.msra.mxu0 0.0
    %389 = vmatprep.mubr.f32.mxu0 0.0
    %390 = vmatmul.mubr.f32.gmra.mxu0 %v323
    %v391 = vpop.f32.mrf.mxu0
    %v392 = vadd.f32 0.0, %v391
    %v393 = vpop.f32.mrf.mxu0
    %394 = vdwg.mxu0
    %395 = vrot.lane.b32.xlu0 %v135, 64
    %v396 = vpop.permute.xlu0 %395
    %v399 = vsel %vm296, %v318, 0
    %401 = vmatprep.subr.mxu0 0.0
    %402 = vmatpush1.msra.mxu0 0.0
    %403 = vmatprep.subr.mxu0 0.0
    %404 = vmatpush1.msra.mxu0 0.0
    %405 = vmatprep.subr.mxu0 0.0
    %406 = vmatpush1.msra.mxu0 0.0
    %407 = vmatprep.subr.mxu0 0.0
    %408 = vmatpush1.msra.mxu0 0.0
    %409 = vmatprep.subr.mxu0 0.0
    %410 = vmatpush1.msra.mxu0 0.0
    %411 = vmatprep.subr.mxu0 0.0
    %412 = vmatpush1.msra.mxu0 0.0
    %413 = vmatprep.subr.mxu0 0.0
    %414 = vmatpush1.msra.mxu0 0.0
    %415 = vmatprep.subr.mxu0 0.0
    %416 = vmatpush1.msra.mxu0 0.0
    %417 = vmatprep.subr.mxu0 0.0
    %418 = vmatpush1.msra.mxu0 0.0
    %419 = vmatprep.subr.mxu0 0.0
    %420 = vmatpush1.msra.mxu0 0.0
    %421 = vmatprep.subr.mxu0 0.0
    %422 = vmatpush1.msra.mxu0 0.0
    %423 = vmatprep.subr.mxu0 0.0
    %424 = vmatpush1.msra.mxu0 0.0
    %425 = vmatprep.subr.mxu0 0.0
    %426 = vmatpush1.msra.mxu0 0.0
    %427 = vmatprep.subr.mxu0 0.0
    %428 = vmatpush1.msra.mxu0 0.0
    %429 = vmatprep.subr.mxu0 0.0
    %430 = vmatpush1.msra.mxu0 0.0
    %431 = vmatprep.subr.mxu0 0.0
    %432 = vmatpush1.msra.mxu0 %v396
    %433 = vmatprep.subr.mxu0 0.0
    %434 = vmatpush2.msra.mxu0 0.0
    %435 = vmatprep.subr.mxu0 0.0
    %436 = vmatpush2.msra.mxu0 0.0
    %437 = vmatprep.subr.mxu0 0.0
    %438 = vmatpush2.msra.mxu0 0.0
    %439 = vmatprep.subr.mxu0 0.0
    %440 = vmatpush2.msra.mxu0 0.0
    %441 = vmatprep.subr.mxu0 0.0
    %442 = vmatpush2.msra.mxu0 0.0
    %443 = vmatprep.subr.mxu0 0.0
    %444 = vmatpush2.msra.mxu0 0.0
    %445 = vmatprep.subr.mxu0 0.0
    %446 = vmatpush2.msra.mxu0 0.0
    %447 = vmatprep.subr.mxu0 0.0
    %448 = vmatpush2.msra.mxu0 0.0
    %449 = vmatprep.subr.mxu0 0.0
    %450 = vmatpush2.msra.mxu0 0.0
    %451 = vmatprep.subr.mxu0 0.0
    %452 = vmatpush2.msra.mxu0 0.0
    %453 = vmatprep.subr.mxu0 0.0
    %454 = vmatpush2.msra.mxu0 0.0
    %455 = vmatprep.subr.mxu0 0.0
    %456 = vmatpush2.msra.mxu0 0.0
    %457 = vmatprep.subr.mxu0 0.0
    %458 = vmatpush2.msra.mxu0 0.0
    %459 = vmatprep.subr.mxu0 0.0
    %460 = vmatpush2.msra.mxu0 0.0
    %461 = vmatprep.subr.mxu0 0.0
    %462 = vmatpush2.msra.mxu0 0.0
    %463 = vmatprep.subr.mxu0 0.0
    %464 = vmatpush2.msra.mxu0 0.0
    %465 = vmatprep.mubr.f32.mxu0 0.0
    %466 = vmatmul.mubr.f32.gmra.mxu0 %v399
    %v467 = vpop.f32.mrf.mxu0
    %v468 = vadd.f32 0.0, %v467
    %v469 = vpop.f32.mrf.mxu0
    %470 = vdwg.mxu0
    %471 = vst.msk [vmem:[#allocation7] sm:$0xff] %vm56, %v392
    %472 = vst.msk [vmem:[#allocation7 + $0x8] sm:$0xff] %vm56, %v468
    // Predicated region
    $region22: #{tpu_custom_call.1} parent=1 // pred_check
      _
    $region23: #{tpu_custom_call.1} parent=1 // pred_check_branch
      %474 = sbr.rel (0) target = $region25
    $region24: #{tpu_custom_call.1} parent=1 // pred_region
      %s476 = ssub.s32 256, 256
      %477 = vsyncadd [#allocation4], %s476
      %s478 = sshll.u32 [#allocation7], 4
      %s479 = int_to_ptr.vmem [resolvable:$true] %s478
      %484 = dma.vmem_to_hbm [thread:$0]  %s479, 256, %s3, [#allocation4], 128, 128, 8
    $region25: #{tpu_custom_call.1} parent=1 // pred_fallthru
      _
    // Predicated region
    $region26: #{tpu_custom_call.1} parent=1 // pred_check
      _
    $region27: #{tpu_custom_call.1} parent=1 // pred_check_branch
      %486 = sbr.rel (0) target = $region29
    $region28: #{tpu_custom_call.1} parent=1 // pred_region
      %487 = dma.done [#allocation4], 256
    $region29: #{tpu_custom_call.1} parent=1 // pred_fallthru
      _
    %488 = vsyncpa [#allocation3], 1
    %489 = vsyncpa [#allocation6], 1
    %490 = vsyncpa [#allocation4], 1

</llo_original>
